<compile_context>
chip_gen: v7x
topology: tpu7x:2x2x1
jax: 0.10.0
libtpu: 0.0.40
codegen_flags: <defaults>
</compile_context>

<pallas_src>
import jax
import jax.numpy as jnp
from jax.experimental import pallas as pl
from jax.experimental.pallas import tpu as pltpu


# ----------------------------------------------------------------------------
# Kernel
# ----------------------------------------------------------------------------
def mog_critic_kernel(obs_ref, w1_ref, w2_ref, w3_ref, b_ref, out_ref):
    H = w2_ref.shape[0]          # hidden width (256)
    OUT = out_ref.shape[-1]      # lane-padded head width (128)

    # bf16 at the MXU inputs only; accumulate / bias / tanh in f32.
    x = obs_ref[...].astype(jnp.bfloat16)                       # [bb, D]

    # ---- fused layer 1: one [bb,D] @ [D,2H] push, then split actor/critic ----
    z = jnp.tanh(jnp.dot(x, w1_ref[...], preferred_element_type=jnp.float32)
                 + b_ref[:, 0:2 * H])
    h = z[:, :H].astype(jnp.bfloat16)      # actor branch hidden (bf16 for MXU)
    c = z[:, H:].astype(jnp.bfloat16)      # critic branch hidden

    # ---- layer 2 (separate branches, different inputs) ----
    h = jnp.tanh(jnp.dot(h, w2_ref[:, :H], preferred_element_type=jnp.float32)
                 + b_ref[:, 2 * H:3 * H])
    c = jnp.tanh(jnp.dot(c, w2_ref[:, H:], preferred_element_type=jnp.float32)
                 + b_ref[:, 3 * H:4 * H])

    # ---- fused, lane-padded heads: one dense [bb, 128] store ----
    # w3[:H, :A]      holds the actor head (means  -> lanes [0, A))
    # w3[H:, A:A+G3]  holds the critic head (value -> lanes [A, A+G3))
    out_ref[...] = (
        jnp.dot(h.astype(jnp.bfloat16), w3_ref[:H, :],
                preferred_element_type=jnp.float32)
        + jnp.dot(c.astype(jnp.bfloat16), w3_ref[H:, :],
                  preferred_element_type=jnp.float32)
        + b_ref[:, 4 * H:4 * H + OUT])


# ----------------------------------------------------------------------------
# Wrapper
# ----------------------------------------------------------------------------
def mog_critic_forward(obs, packed, log_stds, *, block_b=512):
    """Fused actor+critic forward. Returns (logits [B,2A], critic_raw [B,G3])."""
    B, D = obs.shape
    H = packed["w2"].shape[0]
    OUT = packed["w3"].shape[-1]
    A = packed["A"]
    G3 = packed["G3"]

    # Batch tiling: single full-array block for small B; otherwise 512-row
    # blocks (multiple of 256 -> full MXU rows on v6e/v7x).  No explicit
    # padding: cdiv grid + masked partial last block handles ragged B.
    bb = B if B <= block_b else block_b
    grid = (pl.cdiv(B, bb),)

    nrows = grid[0] * bb
    flops = 2 * nrows * (D * 2 * H + 2 * H * H + 2 * H * OUT)
    transcendentals = nrows * 4 * H
    bytes_accessed = (4 * (obs.size + packed["bias"].size + B * OUT)
                      + 2 * (packed["w1"].size + packed["w2"].size
                             + packed["w3"].size))

    # TODO(synk): resident weights (constant index_map) could be single-
    # buffered with pipeline_mode=pl.Buffered(1); negligible at these sizes.
    out = pl.pallas_call(
        mog_critic_kernel,
        out_shape=jax.ShapeDtypeStruct((B, OUT), jnp.float32),
        grid=grid,
        in_specs=[
            pl.BlockSpec((bb, D), lambda i: (i, 0)),          # obs: streams
            pl.BlockSpec((D, 2 * H), lambda i: (0, 0)),       # weights: resident
            pl.BlockSpec((H, 2 * H), lambda i: (0, 0)),
            pl.BlockSpec((2 * H, OUT), lambda i: (0, 0)),
            pl.BlockSpec((1, 4 * H + OUT), lambda i: (0, 0)),
        ],
        out_specs=pl.BlockSpec((bb, OUT), lambda i: (i, 0)),
        compiler_params=pltpu.CompilerParams(
            dimension_semantics=("parallel",),                # both TCs on v7x
            vmem_limit_bytes=32 * 1024 * 1024),
        cost_estimate=pl.CostEstimate(
            flops=flops, transcendentals=transcendentals,
            bytes_accessed=bytes_accessed),
    )(obs, packed["w1"], packed["w2"], packed["w3"], packed["bias"])

    means = out[:, :A]                        # [B, A]
    critic = out[:, A:A + G3]                 # [B, 3*num_gaussians]
    # log_std expand + concat lives in XLA (constant, lane-4 splice would be
    # masked sub-vreg work inside the kernel).
    logits = jnp.concatenate(
        [means, jnp.broadcast_to(log_stds, means.shape)], axis=-1)
    return logits, critic


# ----------------------------------------------------------------------------
# Parameter construction / packing
# ----------------------------------------------------------------------------
def init_params(key, obs_dim, action_dim, hidden=256, num_gaussians=3,
                log_std_init=0.0):
    ks = jax.random.split(key, 6)

    def lin(k, fan_in, fan_out):
        scale = 1.0 / jnp.sqrt(jnp.float32(fan_in))
        kw, kb = jax.random.split(k)
        w = jax.random.uniform(kw, (fan_in, fan_out), jnp.float32, -scale, scale)
        b = jax.random.uniform(kb, (1, fan_out), jnp.float32, -scale, scale)
        return w, b

    aw1, ab1 = lin(ks[0], obs_dim, hidden)
    aw2, ab2 = lin(ks[1], hidden, hidden)
    aw3, ab3 = lin(ks[2], hidden, action_dim)

    cw1, cb1 = lin(ks[3], obs_dim, hidden)
    cw2, cb2 = lin(ks[4], hidden, hidden)
    cw3, cb3 = lin(ks[5], hidden, 3 * num_gaussians)  # (mu, sigma, weight) x G

    log_stds = jnp.full((1, action_dim), log_std_init, jnp.float32)

    return dict(aw1=aw1, ab1=ab1, aw2=aw2, ab2=ab2, aw3=aw3, ab3=ab3,
                cw1=cw1, cb1=cb1, cw2=cw2, cb2=cb2, cw3=cw3, cb3=cb3,
                log_stds=log_stds)


def pack_params(p, out_lanes=128):
    """Consolidate the 12 weight/bias tensors into 4 kernel inputs.

    Weights stored bf16 (MXU operands); biases stay f32.
    """
    A = p["ab3"].shape[-1]
    G3 = p["cb3"].shape[-1]
    H = p["aw2"].shape[0]
    assert A + G3 <= out_lanes

    w1 = jnp.concatenate([p["aw1"], p["cw1"]], axis=1)          # [D, 2H]
    w2 = jnp.concatenate([p["aw2"], p["cw2"]], axis=1)          # [H, 2H]

    w3 = jnp.zeros((2 * H, out_lanes), jnp.float32)
    w3 = w3.at[:H, :A].set(p["aw3"])                            # actor head
    w3 = w3.at[H:, A:A + G3].set(p["cw3"])                      # critic head

    b3 = jnp.zeros((1, out_lanes), jnp.float32)
    b3 = b3.at[:, :A].set(p["ab3"])
    b3 = b3.at[:, A:A + G3].set(p["cb3"])
    bias = jnp.concatenate([p["ab1"], p["cb1"], p["ab2"], p["cb2"], b3],
                           axis=1)                              # [1, 4H+128]

    return dict(w1=w1.astype(jnp.bfloat16),
                w2=w2.astype(jnp.bfloat16),
                w3=w3.astype(jnp.bfloat16),
                bias=bias, A=A, G3=G3)


# ----------------------------------------------------------------------------
# Pure-JAX reference (f32)
# ----------------------------------------------------------------------------
def reference_forward(obs, p):
    h = jnp.tanh(obs @ p["aw1"] + p["ab1"])
    h = jnp.tanh(h @ p["aw2"] + p["ab2"])
    means = h @ p["aw3"] + p["ab3"]
    logits = jnp.concatenate(
        [means, jnp.broadcast_to(p["log_stds"], means.shape)], axis=-1)
    c = jnp.tanh(obs @ p["cw1"] + p["cb1"])
    c = jnp.tanh(c @ p["cw2"] + p["cb2"])
    critic = c @ p["cw3"] + p["cb3"]
    return logits, critic


# TODO(synk): value_function()/custom_loss() (training-time MOG NLL loss) have
# no forward-pass Pallas equivalent and are not implemented here.

if __name__ == "__main__":
    key = jax.random.PRNGKey(0)
    k_obs, k_obs2, k_par = jax.random.split(key, 3)

    OBS_DIM, ACTION_DIM, HIDDEN, NUM_G = 16, 4, 256, 3

    params = init_params(k_par, OBS_DIM, ACTION_DIM, hidden=HIDDEN,
                         num_gaussians=NUM_G, log_std_init=0.0)
    packed = pack_params(params)

    # Tolerance relaxed vs the f32 reference because the MXU operands are bf16.
    TOL = 5e-2

    # --- small batch: single full-array block ---
    B = 8
    obs = jax.random.normal(k_obs, (B, OBS_DIM), jnp.float32)
    logits, critic_raw = mog_critic_forward(obs, packed, params["log_stds"])
    logits = jax.block_until_ready(logits)
    critic_raw = jax.block_until_ready(critic_raw)

    ref_logits, ref_critic = reference_forward(obs, params)
    assert logits.shape == (B, 2 * ACTION_DIM)
    assert critic_raw.shape == (B, 3 * NUM_G)
    assert jnp.allclose(logits, ref_logits, atol=TOL, rtol=TOL)
    assert jnp.allclose(critic_raw, ref_critic, atol=TOL, rtol=TOL)

    # --- ragged batch (not a multiple of the 512-row tile): exercises the
    #     cdiv grid + masked partial last block path ---
    B2 = 520
    obs2 = jax.random.normal(k_obs2, (B2, OBS_DIM), jnp.float32)
    logits2, critic2 = mog_critic_forward(obs2, packed, params["log_stds"])
    logits2 = jax.block_until_ready(logits2)
    critic2 = jax.block_until_ready(critic2)

    ref_logits2, ref_critic2 = reference_forward(obs2, params)
    assert logits2.shape == (B2, 2 * ACTION_DIM)
    assert critic2.shape == (B2, 3 * NUM_G)
    assert jnp.allclose(logits2, ref_logits2, atol=TOL, rtol=TOL)
    assert jnp.allclose(critic2, ref_critic2, atol=TOL, rtol=TOL)

    print("KERNEL_OK")
</pallas_src>

<mosaic_0001>
module attributes {stable_mosaic.version = 11 : i64} {
  func.func @mog_critic_kernel(%arg0: i32, %arg1: memref<8x16xf32, #tpu.memory_space<vmem>>, %arg2: memref<16x512xbf16, #tpu.memory_space<vmem>>, %arg3: memref<256x512xbf16, #tpu.memory_space<vmem>>, %arg4: memref<512x128xbf16, #tpu.memory_space<vmem>>, %arg5: memref<1x1152xf32, #tpu.memory_space<vmem>>, %arg6: memref<8x128xf32, #tpu.memory_space<vmem>>) attributes {dimension_semantics = [#tpu.dimension_semantics<parallel>], iteration_bounds = array<i64: 1>, scalar_prefetch = 0 : i64, scratch_operands = 0 : i64, tpu.core_type = #tpu.core_type<tc>, window_params = [{transform_indices = @transform_0, window_bounds = array<i64: 8, 16>}, {pipeline_mode = #tpu.pipeline_mode<synchronous>, transform_indices = @transform_1, window_bounds = array<i64: 16, 512>}, {pipeline_mode = #tpu.pipeline_mode<synchronous>, transform_indices = @transform_2, window_bounds = array<i64: 256, 512>}, {pipeline_mode = #tpu.pipeline_mode<synchronous>, transform_indices = @transform_3, window_bounds = array<i64: 512, 128>}, {pipeline_mode = #tpu.pipeline_mode<synchronous>, transform_indices = @transform_4, window_bounds = array<i64: 1, 1152>}, {transform_indices = @transform_5, window_bounds = array<i64: 8, 128>}]} {
    %c0 = arith.constant 0 : index
    %c0_0 = arith.constant 0 : index
    %0 = vector.load %arg1[%c0, %c0_0] : memref<8x16xf32, #tpu.memory_space<vmem>>, vector<8x16xf32>
    %1 = arith.truncf %0 : vector<8x16xf32> to vector<8x16xbf16>
    %c0_1 = arith.constant 0 : index
    %c0_2 = arith.constant 0 : index
    %2 = vector.load %arg2[%c0_1, %c0_2] : memref<16x512xbf16, #tpu.memory_space<vmem>>, vector<16x512xbf16>
    %cst = arith.constant dense<0.000000e+00> : vector<8x512xf32>
    %3 = tpu.matmul %1, %2, %cst {dimension_numbers = #tpu.dot_dimension_numbers<[1], [0], [0], [1], [0, 0, 1, 1], [], []>} : vector<8x16xbf16>, vector<16x512xbf16>, vector<8x512xf32> -> vector<8x512xf32>
    %c0_3 = arith.constant 0 : index
    %c0_4 = arith.constant 0 : index
    %4 = vector.load %arg5[%c0_3, %c0_4] : memref<1x1152xf32, #tpu.memory_space<vmem>>, vector<1x512xf32>
    %5 = vector.broadcast %4 : vector<1x512xf32> to vector<8x512xf32>
    %6 = arith.addf %3, %5 : vector<8x512xf32>
    %7 = math.tanh %6 : vector<8x512xf32>
    %8 = vector.extract_strided_slice %7 {offsets = [0, 0], sizes = [8, 256], strides = [1, 1]} : vector<8x512xf32> to vector<8x256xf32>
    %9 = arith.truncf %8 : vector<8x256xf32> to vector<8x256xbf16>
    %10 = vector.extract_strided_slice %7 {offsets = [0, 256], sizes = [8, 256], strides = [1, 1]} : vector<8x512xf32> to vector<8x256xf32>
    %11 = arith.truncf %10 : vector<8x256xf32> to vector<8x256xbf16>
    %c0_5 = arith.constant 0 : index
    %c0_6 = arith.constant 0 : index
    %12 = vector.load %arg3[%c0_5, %c0_6] : memref<256x512xbf16, #tpu.memory_space<vmem>>, vector<256x256xbf16>
    %cst_7 = arith.constant dense<0.000000e+00> : vector<8x256xf32>
    %13 = tpu.matmul %9, %12, %cst_7 {dimension_numbers = #tpu.dot_dimension_numbers<[1], [0], [0], [1], [0, 0, 1, 1], [], []>} : vector<8x256xbf16>, vector<256x256xbf16>, vector<8x256xf32> -> vector<8x256xf32>
    %c0_8 = arith.constant 0 : index
    %c512 = arith.constant 512 : index
    %14 = vector.load %arg5[%c0_8, %c512] : memref<1x1152xf32, #tpu.memory_space<vmem>>, vector<1x256xf32>
    %15 = vector.broadcast %14 : vector<1x256xf32> to vector<8x256xf32>
    %16 = arith.addf %13, %15 : vector<8x256xf32>
    %17 = math.tanh %16 : vector<8x256xf32>
    %c0_9 = arith.constant 0 : index
    %c256 = arith.constant 256 : index
    %18 = vector.load %arg3[%c0_9, %c256] : memref<256x512xbf16, #tpu.memory_space<vmem>>, vector<256x256xbf16>
    %cst_10 = arith.constant dense<0.000000e+00> : vector<8x256xf32>
    %19 = tpu.matmul %11, %18, %cst_10 {dimension_numbers = #tpu.dot_dimension_numbers<[1], [0], [0], [1], [0, 0, 1, 1], [], []>} : vector<8x256xbf16>, vector<256x256xbf16>, vector<8x256xf32> -> vector<8x256xf32>
    %c0_11 = arith.constant 0 : index
    %c768 = arith.constant 768 : index
    %20 = vector.load %arg5[%c0_11, %c768] : memref<1x1152xf32, #tpu.memory_space<vmem>>, vector<1x256xf32>
    %21 = vector.broadcast %20 : vector<1x256xf32> to vector<8x256xf32>
    %22 = arith.addf %19, %21 : vector<8x256xf32>
    %23 = math.tanh %22 : vector<8x256xf32>
    %24 = arith.truncf %17 : vector<8x256xf32> to vector<8x256xbf16>
    %c0_12 = arith.constant 0 : index
    %c0_13 = arith.constant 0 : index
    %25 = vector.load %arg4[%c0_12, %c0_13] : memref<512x128xbf16, #tpu.memory_space<vmem>>, vector<256x128xbf16>
    %cst_14 = arith.constant dense<0.000000e+00> : vector<8x128xf32>
    %26 = tpu.matmul %24, %25, %cst_14 {dimension_numbers = #tpu.dot_dimension_numbers<[1], [0], [0], [1], [0, 0, 1, 1], [], []>} : vector<8x256xbf16>, vector<256x128xbf16>, vector<8x128xf32> -> vector<8x128xf32>
    %27 = arith.truncf %23 : vector<8x256xf32> to vector<8x256xbf16>
    %c256_15 = arith.constant 256 : index
    %c0_16 = arith.constant 0 : index
    %28 = vector.load %arg4[%c256_15, %c0_16] : memref<512x128xbf16, #tpu.memory_space<vmem>>, vector<256x128xbf16>
    %cst_17 = arith.constant dense<0.000000e+00> : vector<8x128xf32>
    %29 = tpu.matmul %27, %28, %cst_17 {dimension_numbers = #tpu.dot_dimension_numbers<[1], [0], [0], [1], [0, 0, 1, 1], [], []>} : vector<8x256xbf16>, vector<256x128xbf16>, vector<8x128xf32> -> vector<8x128xf32>
    %30 = arith.addf %26, %29 : vector<8x128xf32>
    %c0_18 = arith.constant 0 : index
    %c1024 = arith.constant 1024 : index
    %31 = vector.load %arg5[%c0_18, %c1024] : memref<1x1152xf32, #tpu.memory_space<vmem>>, vector<1x128xf32>
    %32 = vector.broadcast %31 : vector<1x128xf32> to vector<8x128xf32>
    %33 = arith.addf %30, %32 : vector<8x128xf32>
    %c0_19 = arith.constant 0 : index
    %c0_20 = arith.constant 0 : index
    %34 = vector.load %arg6[%c0_19, %c0_20] : memref<8x128xf32, #tpu.memory_space<vmem>>, vector<8x128xf32>
    tpu.vector_store %arg6[%c0_19, %c0_20], %33 {strides = array<i32>} : memref<8x128xf32, #tpu.memory_space<vmem>>, vector<8x128xf32>,
    return
  }
  func.func @transform_0(%arg0: i32) -> (i32, i32) {
    %c0_i32 = arith.constant 0 : i32
    %c0_i32_0 = arith.constant 0 : i32
    return %arg0, %c0_i32 : i32, i32
  }
  func.func @transform_1(%arg0: i32) -> (i32, i32) {
    %c0_i32 = arith.constant 0 : i32
    %c0_i32_0 = arith.constant 0 : i32
    %c0_i32_1 = arith.constant 0 : i32
    return %c0_i32, %c0_i32_0 : i32, i32
  }
  func.func @transform_2(%arg0: i32) -> (i32, i32) {
    %c0_i32 = arith.constant 0 : i32
    %c0_i32_0 = arith.constant 0 : i32
    %c0_i32_1 = arith.constant 0 : i32
    return %c0_i32, %c0_i32_0 : i32, i32
  }
  func.func @transform_3(%arg0: i32) -> (i32, i32) {
    %c0_i32 = arith.constant 0 : i32
    %c0_i32_0 = arith.constant 0 : i32
    %c0_i32_1 = arith.constant 0 : i32
    return %c0_i32, %c0_i32_0 : i32, i32
  }
  func.func @transform_4(%arg0: i32) -> (i32, i32) {
    %c0_i32 = arith.constant 0 : i32
    %c0_i32_0 = arith.constant 0 : i32
    %c0_i32_1 = arith.constant 0 : i32
    return %c0_i32, %c0_i32_0 : i32, i32
  }
  func.func @transform_5(%arg0: i32) -> (i32, i32) {
    %c0_i32 = arith.constant 0 : i32
    %c0_i32_0 = arith.constant 0 : i32
    return %arg0, %c0_i32 : i32, i32
  }
}

</mosaic_0001>

<llo_original>
// kernel: tpu_custom_call.1
$region0: #{tpu_custom_call.1}
  #allocation0 [shape = 'u32[]', space=smem, size = 0x4, offset = 0x4, fixed_abs, tag = 'smem constant byte address 0x4 - core index']
  #allocation1 [shape = 'u32[144,128]{1,0:T(1,128)}', space=vmem, size = 0x12000, scoped, tag = 'internal scratch']
  %s0 = inlined_call_operand.hbm [shape: f32[8,16], index: 0, kind: input, shape index: {}]
  %s1 = inlined_call_operand.hbm [shape: bf16[16,512], index: 1, kind: input, shape index: {}]
  %s2 = inlined_call_operand.hbm [shape: bf16[256,512], index: 2, kind: input, shape index: {}]
  %s3 = inlined_call_operand.hbm [shape: bf16[512,128], index: 3, kind: input, shape index: {}]
  %s4 = inlined_call_operand.vmem [shape: f32[1,1152], index: 4, kind: input, shape index: {}]
  %s5 = inlined_call_operand.hbm [shape: f32[8,128], index: 5, kind: output, shape index: {}]
  %s6 = sld [smem:[#allocation0]]
  $region46: #{tpu_custom_call.1} parent=0
    _
  %s8 = ssub.s32 1, %s6
  %s9 = scalar_select 0, %s8, %s6
  $region1: #{tpu_custom_call.1} parent=0
    #allocation2 [shape = 'u8[4096]{0}', space=vmem, size = 0x1000, scoped, tag = 'input window, operand 0, single buffered']
    #allocation3 [shape = 's32[1]{0}', space=sflag, size = 0x4, scoped, tag = 'scoped memory for tpu_custom_call.1']
    #allocation4 [shape = 's32[1]{0}', space=sflag, size = 0x4, scoped, tag = 'scoped memory for tpu_custom_call.1']
    #allocation5 [shape = 'u8[16384]{0}', space=vmem, size = 0x4000, scoped, tag = 'input window, operand 1, single buffered']
    #allocation6 [shape = 's32[1]{0}', space=sflag, size = 0x4, scoped, tag = 'scoped memory for tpu_custom_call.1']
    #allocation7 [shape = 'u8[262144]{0}', space=vmem, size = 0x40000, scoped, tag = 'input window, operand 2, single buffered']
    #allocation8 [shape = 'u8[131072]{0}', space=vmem, size = 0x20000, scoped, tag = 'input window, operand 3, single buffered']
    #allocation9 [shape = 's32[1]{0}', space=sflag, size = 0x4, scoped, tag = 'scoped memory for tpu_custom_call.1']
    #allocation10 [shape = 'u8[4096]{0}', space=vmem, size = 0x1000, scoped, tag = 'output window, operand 0, single buffered']
    %10 = vsyncpa [#allocation3], 0
    %11 = vsyncpa [#allocation6], 0
    %12 = vsyncpa [#allocation9], 0
    %13 = vsyncpa [#allocation4], 0
    // Predicated region
    $region2: #{tpu_custom_call.1} parent=1 // pred_check
      _
    $region3: #{tpu_custom_call.1} parent=1 // pred_check_branch
      %15 = sbr.rel (0) target = $region5
    $region4: #{tpu_custom_call.1} parent=1 // pred_region
      %s17 = ssub.s32 128, 128
      %18 = vsyncadd [#allocation3], %s17
      %s20 = sshll.u32 [#allocation2], 4
      %s21 = int_to_ptr.vmem [resolvable:$true] %s20
      %23 = dma.hbm_to_vmem [thread:$0]  %s0, 128, %s21, [#allocation3]
    $region5: #{tpu_custom_call.1} parent=1 // pred_fallthru
      _
    // Predicated region
    $region6: #{tpu_custom_call.1} parent=1 // pred_check
      _
    $region7: #{tpu_custom_call.1} parent=1 // pred_check_branch
      %25 = sbr.rel (0) target = $region9
    $region8: #{tpu_custom_call.1} parent=1 // pred_region
      %s27 = ssub.s32 512, 512
      %28 = vsyncadd [#allocation6], %s27
      %s29 = sshll.u32 [#allocation5], 4
      %s30 = int_to_ptr.vmem [resolvable:$true] %s29
      %35 = dma.hbm_to_vmem [thread:$0]  %s1, 512, %s30, [#allocation6], 256, 256, 16
    $region9: #{tpu_custom_call.1} parent=1 // pred_fallthru
      _
    // Predicated region
    $region10: #{tpu_custom_call.1} parent=1 // pred_check
      _
    $region11: #{tpu_custom_call.1} parent=1 // pred_check_branch
      %37 = sbr.rel (0) target = $region13
    $region12: #{tpu_custom_call.1} parent=1 // pred_region
      %s39 = ssub.s32 8192, 8192
      %40 = vsyncadd [#allocation6], %s39
      %s41 = sshll.u32 [#allocation7], 4
      %s42 = int_to_ptr.vmem [resolvable:$true] %s41
      %47 = dma.hbm_to_vmem [thread:$0]  %s2, 8192, %s42, [#allocation6], 256, 256, 16
    $region13: #{tpu_custom_call.1} parent=1 // pred_fallthru
      _
    // Predicated region
    $region14: #{tpu_custom_call.1} parent=1 // pred_check
      _
    $region15: #{tpu_custom_call.1} parent=1 // pred_check_branch
      %49 = sbr.rel (0) target = $region17
    $region16: #{tpu_custom_call.1} parent=1 // pred_region
      %s51 = ssub.s32 4096, 4096
      %52 = vsyncadd [#allocation9], %s51
      %s53 = sshll.u32 [#allocation8], 4
      %s54 = int_to_ptr.vmem [resolvable:$true] %s53
      %59 = dma.hbm_to_vmem [thread:$0]  %s3, 4096, %s54, [#allocation9], 64, 64, 4
    $region17: #{tpu_custom_call.1} parent=1 // pred_fallthru
      _
    // Predicated region
    $region18: #{tpu_custom_call.1} parent=1 // pred_check
      _
    $region19: #{tpu_custom_call.1} parent=1 // pred_check_branch
      %61 = sbr.rel (0) target = $region21
    $region20: #{tpu_custom_call.1} parent=1 // pred_region
      _
    $region21: #{tpu_custom_call.1} parent=1 // pred_fallthru
      _
    // Predicated region
    $region22: #{tpu_custom_call.1} parent=1 // pred_check
      _
    $region23: #{tpu_custom_call.1} parent=1 // pred_check_branch
      %63 = sbr.rel (0) target = $region25
    $region24: #{tpu_custom_call.1} parent=1 // pred_region
      %64 = dma.done [#allocation3], 128
    $region25: #{tpu_custom_call.1} parent=1 // pred_fallthru
      _
    // Predicated region
    $region26: #{tpu_custom_call.1} parent=1 // pred_check
      _
    $region27: #{tpu_custom_call.1} parent=1 // pred_check_branch
      %66 = sbr.rel (0) target = $region29
    $region28: #{tpu_custom_call.1} parent=1 // pred_region
      %67 = dma.done [#allocation6], 512
    $region29: #{tpu_custom_call.1} parent=1 // pred_fallthru
      _
    // Predicated region
    $region30: #{tpu_custom_call.1} parent=1 // pred_check
      _
    $region31: #{tpu_custom_call.1} parent=1 // pred_check_branch
      %69 = sbr.rel (0) target = $region33
    $region32: #{tpu_custom_call.1} parent=1 // pred_region
      %70 = dma.done [#allocation6], 8192
    $region33: #{tpu_custom_call.1} parent=1 // pred_fallthru
      _
    // Predicated region
    $region34: #{tpu_custom_call.1} parent=1 // pred_check
      _
    $region35: #{tpu_custom_call.1} parent=1 // pred_check_branch
      %72 = sbr.rel (0) target = $region37
    $region36: #{tpu_custom_call.1} parent=1 // pred_region
      %73 = dma.done [#allocation9], 4096
    $region37: #{tpu_custom_call.1} parent=1 // pred_fallthru
      _
    %v75 = vld [vmem:[#allocation2] sm:$0xff]
    %v76 = vpack.c.bf16 %v75, %v75
    %v77 = vld [vmem:[#allocation5] sm:$0xff]
    %v78 = vld [vmem:[#allocation5 + $0x8] sm:$0xff]
    %v79 = vld [vmem:[#allocation5 + $0x10] sm:$0xff]
    %v80 = vld [vmem:[#allocation5 + $0x18] sm:$0xff]
    %v81 = vld [vmem:[%s4] sm:$0xf]
    %v83 = vlaneseq
    %v84 = vshrl.u32 %v83, 7
    %v85 = vsub.s32 0, %v84
    %v86 = vrot.slane %v81, %v85
    %v87 = vlaneseq
    %v88 = vshrl.u32 %v87, 7
    %v89 = vsub.s32 1, %v88
    %v90 = vrot.slane %v81, %v89
    %v91 = vlaneseq
    %v92 = vshrl.u32 %v91, 7
    %v93 = vsub.s32 2, %v92
    %v94 = vrot.slane %v81, %v93
    %v95 = vlaneseq
    %v96 = vshrl.u32 %v95, 7
    %v97 = vsub.s32 3, %v96
    %v98 = vrot.slane %v81, %v97
    %v107 = vunpack.c.l.b16 %v77
    %v108 = vunpack.c.h.b16 %v77
    %v109 = vunpack.c.l.b16 %v78
    %v110 = vunpack.c.h.b16 %v78
    %v111 = vunpack.c.l.b16 %v79
    %v112 = vunpack.c.h.b16 %v79
    %v113 = vunpack.c.l.b16 %v80
    %v114 = vunpack.c.h.b16 %v80
    %v115 = vpack.c.b16 %v111, %v107
    %v116 = vpack.c.b16 %v112, %v108
    %v117 = vpack.c.b16 %v113, %v109
    %v118 = vpack.c.b16 %v114, %v110
    %vm123 = vcmask 130048
    %v125 = vsel %vm123, %v76, 0
    %127 = vmatprep.subr.bf16.mxu0 %v116
    %128 = vmatpush1.bf16.msra.mxu0 %v115
    %129 = vmatprep.subr.bf16.mxu0 0
    %130 = vmatpush1.bf16.msra.mxu0 0
    %131 = vmatprep.subr.bf16.mxu0 0
    %132 = vmatpush1.bf16.msra.mxu0 0
    %133 = vmatprep.subr.bf16.mxu0 0
    %134 = vmatpush1.bf16.msra.mxu0 0
    %135 = vmatprep.subr.bf16.mxu0 0
    %136 = vmatpush1.bf16.msra.mxu0 0
    %137 = vmatprep.subr.bf16.mxu0 0
    %138 = vmatpush1.bf16.msra.mxu0 0
    %139 = vmatprep.subr.bf16.mxu0 0
    %140 = vmatpush1.bf16.msra.mxu0 0
    %141 = vmatprep.subr.bf16.mxu0 0
    %142 = vmatpush1.bf16.msra.mxu0 0
    %143 = vmatprep.subr.bf16.mxu0 0
    %144 = vmatpush1.bf16.msra.mxu0 0
    %145 = vmatprep.subr.bf16.mxu0 0
    %146 = vmatpush1.bf16.msra.mxu0 0
    %147 = vmatprep.subr.bf16.mxu0 0
    %148 = vmatpush1.bf16.msra.mxu0 0
    %149 = vmatprep.subr.bf16.mxu0 0
    %150 = vmatpush1.bf16.msra.mxu0 0
    %151 = vmatprep.subr.bf16.mxu0 0
    %152 = vmatpush1.bf16.msra.mxu0 0
    %153 = vmatprep.subr.bf16.mxu0 0
    %154 = vmatpush1.bf16.msra.mxu0 0
    %155 = vmatprep.subr.bf16.mxu0 0
    %156 = vmatpush1.bf16.msra.mxu0 0
    %157 = vmatprep.subr.bf16.mxu0 0
    %158 = vmatpush1.bf16.msra.mxu0 0
    %159 = vmatprep.mubr.bf16.mxu0 0
    %160 = vmatmul.mubr.bf16.gmra.mrb[0].mxu0 %v125
    %v161 = vpop.f32.mrb[0].mxu0
    %v162 = vadd.f32 %v86, %v161
    %v163 = vpop.f32.mrb[0].mxu0
    %v164 = vadd.f32 %v90, %v163
    %v165 = vpop.f32.mrb[0].mxu0
    %v166 = vpop.f32.mrb[0].mxu0
    %167 = vdwg.mxu0
    %168 = vmatprep.subr.bf16.mxu0 %v118
    %169 = vmatpush1.bf16.msra.mxu0 %v117
    %170 = vmatprep.subr.bf16.mxu0 0
    %171 = vmatpush1.bf16.msra.mxu0 0
    %172 = vmatprep.subr.bf16.mxu0 0
    %173 = vmatpush1.bf16.msra.mxu0 0
    %174 = vmatprep.subr.bf16.mxu0 0
    %175 = vmatpush1.bf16.msra.mxu0 0
    %176 = vmatprep.subr.bf16.mxu0 0
    %177 = vmatpush1.bf16.msra.mxu0 0
    %178 = vmatprep.subr.bf16.mxu0 0
    %179 = vmatpush1.bf16.msra.mxu0 0
    %180 = vmatprep.subr.bf16.mxu0 0
    %181 = vmatpush1.bf16.msra.mxu0 0
    %182 = vmatprep.subr.bf16.mxu0 0
    %183 = vmatpush1.bf16.msra.mxu0 0
    %184 = vmatprep.subr.bf16.mxu0 0
    %185 = vmatpush1.bf16.msra.mxu0 0
    %186 = vmatprep.subr.bf16.mxu0 0
    %187 = vmatpush1.bf16.msra.mxu0 0
    %188 = vmatprep.subr.bf16.mxu0 0
    %189 = vmatpush1.bf16.msra.mxu0 0
    %190 = vmatprep.subr.bf16.mxu0 0
    %191 = vmatpush1.bf16.msra.mxu0 0
    %192 = vmatprep.subr.bf16.mxu0 0
    %193 = vmatpush1.bf16.msra.mxu0 0
    %194 = vmatprep.subr.bf16.mxu0 0
    %195 = vmatpush1.bf16.msra.mxu0 0
    %196 = vmatprep.subr.bf16.mxu0 0
    %197 = vmatpush1.bf16.msra.mxu0 0
    %198 = vmatprep.subr.bf16.mxu0 0
    %199 = vmatpush1.bf16.msra.mxu0 0
    %200 = vmatprep.mubr.bf16.mxu0 0
    %201 = vmatmul.mubr.bf16.gmra.mrb[0].mxu0 %v125
    %v202 = vpop.f32.mrb[0].mxu0
    %v203 = vadd.f32 %v94, %v202
    %v204 = vpop.f32.mrb[0].mxu0
    %v205 = vadd.f32 %v98, %v204
    %v206 = vpop.f32.mrb[0].mxu0
    %v207 = vpop.f32.mrb[0].mxu0
    %208 = vdwg.mxu0
    %v209 = vtanh.pop %v162
    %v210 = vtanh.pop %v164
    %v211 = vtanh.pop %v203
    %v212 = vtanh.pop %v205
    %v213 = vpack.c.bf16 %v209, %v209
    %v214 = vpack.c.bf16 %v210, %v210
    %v215 = vpack.c.bf16 %v211, %v211
    %v216 = vpack.c.bf16 %v212, %v212
    %v217 = vld [vmem:[#allocation7] sm:$0xff]
    %v218 = vld [vmem:[#allocation7 + $0x10] sm:$0xff]
    %v219 = vld [vmem:[#allocation7 + $0x20] sm:$0xff]
    %v220 = vld [vmem:[#allocation7 + $0x30] sm:$0xff]
    %v221 = vld [vmem:[#allocation7 + $0x40] sm:$0xff]
    %v222 = vld [vmem:[#allocation7 + $0x50] sm:$0xff]
    %v223 = vld [vmem:[#allocation7 + $0x60] sm:$0xff]
    %v224 = vld [vmem:[#allocation7 + $0x70] sm:$0xff]
    %v225 = vld [vmem:[#allocation7 + $0x80] sm:$0xff]
    %v226 = vld [vmem:[#allocation7 + $0x90] sm:$0xff]
    %v227 = vld [vmem:[#allocation7 + $0xa0] sm:$0xff]
    %v228 = vld [vmem:[#allocation7 + $0xb0] sm:$0xff]
    %v229 = vld [vmem:[#allocation7 + $0xc0] sm:$0xff]
    %v230 = vld [vmem:[#allocation7 + $0xd0] sm:$0xff]
    %v231 = vld [vmem:[#allocation7 + $0xe0] sm:$0xff]
    %v232 = vld [vmem:[#allocation7 + $0xf0] sm:$0xff]
    %v233 = vld [vmem:[#allocation7 + $0x100] sm:$0xff]
    %v234 = vld [vmem:[#allocation7 + $0x110] sm:$0xff]
    %v235 = vld [vmem:[#allocation7 + $0x120] sm:$0xff]
    %v236 = vld [vmem:[#allocation7 + $0x130] sm:$0xff]
    %v237 = vld [vmem:[#allocation7 + $0x140] sm:$0xff]
    %v238 = vld [vmem:[#allocation7 + $0x150] sm:$0xff]
    %v239 = vld [vmem:[#allocation7 + $0x160] sm:$0xff]
    %v240 = vld [vmem:[#allocation7 + $0x170] sm:$0xff]
    %v241 = vld [vmem:[#allocation7 + $0x180] sm:$0xff]
    %v242 = vld [vmem:[#allocation7 + $0x190] sm:$0xff]
    %v243 = vld [vmem:[#allocation7 + $0x1a0] sm:$0xff]
    %v244 = vld [vmem:[#allocation7 + $0x1b0] sm:$0xff]
    %v245 = vld [vmem:[#allocation7 + $0x1c0] sm:$0xff]
    %v246 = vld [vmem:[#allocation7 + $0x1d0] sm:$0xff]
    %v247 = vld [vmem:[#allocation7 + $0x1e0] sm:$0xff]
    %v248 = vld [vmem:[#allocation7 + $0x1f0] sm:$0xff]
    %v249 = vld [vmem:[%s4 + $0x4] sm:$0x3]
    %v251 = vlaneseq
    %v252 = vshrl.u32 %v251, 7
    %v253 = vsub.s32 0, %v252
    %v254 = vrot.slane %v249, %v253
    %v255 = vlaneseq
    %v256 = vshrl.u32 %v255, 7
    %v257 = vsub.s32 1, %v256
    %v258 = vrot.slane %v249, %v257
    %v293 = vunpack.c.l.b16 %v217
    %v294 = vunpack.c.h.b16 %v217
    %v295 = vunpack.c.l.b16 %v218
    %v296 = vunpack.c.h.b16 %v218
    %v297 = vunpack.c.l.b16 %v219
    %v298 = vunpack.c.h.b16 %v219
    %v299 = vunpack.c.l.b16 %v220
    %v300 = vunpack.c.h.b16 %v220
    %v301 = vunpack.c.l.b16 %v221
    %v302 = vunpack.c.h.b16 %v221
    %v303 = vunpack.c.l.b16 %v222
    %v304 = vunpack.c.h.b16 %v222
    %v305 = vunpack.c.l.b16 %v223
    %v306 = vunpack.c.h.b16 %v223
    %v307 = vunpack.c.l.b16 %v224
    %v308 = vunpack.c.h.b16 %v224
    %v309 = vunpack.c.l.b16 %v225
    %v310 = vunpack.c.h.b16 %v225
    %v311 = vunpack.c.l.b16 %v226
    %v312 = vunpack.c.h.b16 %v226
    %v313 = vunpack.c.l.b16 %v227
    %v314 = vunpack.c.h.b16 %v227
    %v315 = vunpack.c.l.b16 %v228
    %v316 = vunpack.c.h.b16 %v228
    %v317 = vunpack.c.l.b16 %v229
    %v318 = vunpack.c.h.b16 %v229
    %v319 = vunpack.c.l.b16 %v230
    %v320 = vunpack.c.h.b16 %v230
    %v321 = vunpack.c.l.b16 %v231
    %v322 = vunpack.c.h.b16 %v231
    %v323 = vunpack.c.l.b16 %v232
    %v324 = vunpack.c.h.b16 %v232
    %v325 = vunpack.c.l.b16 %v233
    %v326 = vunpack.c.h.b16 %v233
    %v327 = vunpack.c.l.b16 %v234
    %v328 = vunpack.c.h.b16 %v234
    %v329 = vunpack.c.l.b16 %v235
    %v330 = vunpack.c.h.b16 %v235
    %v331 = vunpack.c.l.b16 %v236
    %v332 = vunpack.c.h.b16 %v236
    %v333 = vunpack.c.l.b16 %v237
    %v334 = vunpack.c.h.b16 %v237
    %v335 = vunpack.c.l.b16 %v238
    %v336 = vunpack.c.h.b16 %v238
    %v337 = vunpack.c.l.b16 %v239
    %v338 = vunpack.c.h.b16 %v239
    %v339 = vunpack.c.l.b16 %v240
    %v340 = vunpack.c.h.b16 %v240
    %v341 = vunpack.c.l.b16 %v241
    %v342 = vunpack.c.h.b16 %v241
    %v343 = vunpack.c.l.b16 %v242
    %v344 = vunpack.c.h.b16 %v242
    %v345 = vunpack.c.l.b16 %v243
    %v346 = vunpack.c.h.b16 %v243
    %v347 = vunpack.c.l.b16 %v244
    %v348 = vunpack.c.h.b16 %v244
    %v349 = vunpack.c.l.b16 %v245
    %v350 = vunpack.c.h.b16 %v245
    %v351 = vunpack.c.l.b16 %v246
    %v352 = vunpack.c.h.b16 %v246
    %v353 = vunpack.c.l.b16 %v247
    %v354 = vunpack.c.h.b16 %v247
    %v355 = vunpack.c.l.b16 %v248
    %v356 = vunpack.c.h.b16 %v248
    %v357 = vpack.c.b16 %v295, %v293
    %v358 = vpack.c.b16 %v296, %v294
    %v359 = vpack.c.b16 %v299, %v297
    %v360 = vpack.c.b16 %v300, %v298
    %v361 = vpack.c.b16 %v303, %v301
    %v362 = vpack.c.b16 %v304, %v302
    %v363 = vpack.c.b16 %v307, %v305
    %v364 = vpack.c.b16 %v308, %v306
    %v365 = vpack.c.b16 %v311, %v309
    %v366 = vpack.c.b16 %v312, %v310
    %v367 = vpack.c.b16 %v315, %v313
    %v368 = vpack.c.b16 %v316, %v314
    %v369 = vpack.c.b16 %v319, %v317
    %v370 = vpack.c.b16 %v320, %v318
    %v371 = vpack.c.b16 %v323, %v321
    %v372 = vpack.c.b16 %v324, %v322
    %v373 = vpack.c.b16 %v327, %v325
    %v374 = vpack.c.b16 %v328, %v326
    %v375 = vpack.c.b16 %v331, %v329
    %v376 = vpack.c.b16 %v332, %v330
    %v377 = vpack.c.b16 %v335, %v333
    %v378 = vpack.c.b16 %v336, %v334
    %v379 = vpack.c.b16 %v339, %v337
    %v380 = vpack.c.b16 %v340, %v338
    %v381 = vpack.c.b16 %v343, %v341
    %v382 = vpack.c.b16 %v344, %v342
    %v383 = vpack.c.b16 %v347, %v345
    %v384 = vpack.c.b16 %v348, %v346
    %v385 = vpack.c.b16 %v351, %v349
    %v386 = vpack.c.b16 %v352, %v350
    %v387 = vpack.c.b16 %v355, %v353
    %v388 = vpack.c.b16 %v356, %v354
    %421 = vmatprep.subr.bf16.mxu0 %v358
    %422 = vmatpush1.bf16.msra.mxu0 %v357
    %423 = vmatprep.subr.bf16.mxu0 %v360
    %424 = vmatpush1.bf16.msra.mxu0 %v359
    %425 = vmatprep.subr.bf16.mxu0 %v362
    %426 = vmatpush1.bf16.msra.mxu0 %v361
    %427 = vmatprep.subr.bf16.mxu0 %v364
    %428 = vmatpush1.bf16.msra.mxu0 %v363
    %429 = vmatprep.subr.bf16.mxu0 %v366
    %430 = vmatpush1.bf16.msra.mxu0 %v365
    %431 = vmatprep.subr.bf16.mxu0 %v368
    %432 = vmatpush1.bf16.msra.mxu0 %v367
    %433 = vmatprep.subr.bf16.mxu0 %v370
    %434 = vmatpush1.bf16.msra.mxu0 %v369
    %435 = vmatprep.subr.bf16.mxu0 %v372
    %436 = vmatpush1.bf16.msra.mxu0 %v371
    %437 = vmatprep.subr.bf16.mxu0 %v374
    %438 = vmatpush1.bf16.msra.mxu0 %v373
    %439 = vmatprep.subr.bf16.mxu0 %v376
    %440 = vmatpush1.bf16.msra.mxu0 %v375
    %441 = vmatprep.subr.bf16.mxu0 %v378
    %442 = vmatpush1.bf16.msra.mxu0 %v377
    %443 = vmatprep.subr.bf16.mxu0 %v380
    %444 = vmatpush1.bf16.msra.mxu0 %v379
    %445 = vmatprep.subr.bf16.mxu0 %v382
    %446 = vmatpush1.bf16.msra.mxu0 %v381
    %447 = vmatprep.subr.bf16.mxu0 %v384
    %448 = vmatpush1.bf16.msra.mxu0 %v383
    %449 = vmatprep.subr.bf16.mxu0 %v386
    %450 = vmatpush1.bf16.msra.mxu0 %v385
    %451 = vmatprep.subr.bf16.mxu0 %v388
    %452 = vmatpush1.bf16.msra.mxu0 %v387
    %453 = vmatprep.mubr.bf16.mxu0 %v214
    %454 = vmatmul.mubr.bf16.gmra.mrb[0].mxu0 %v213
    %v455 = vpop.f32.mrb[0].mxu0
    %v456 = vadd.f32 %v254, %v455
    %v457 = vpop.f32.mrb[0].mxu0
    %v458 = vadd.f32 %v258, %v457
    %v459 = vpop.f32.mrb[0].mxu0
    %v460 = vpop.f32.mrb[0].mxu0
    %461 = vdwg.mxu0
    %v462 = vtanh.pop %v456
    %v463 = vtanh.pop %v458
    %v464 = vld [vmem:[#allocation7 + $0x8] sm:$0xff]
    %v465 = vld [vmem:[#allocation7 + $0x18] sm:$0xff]
    %v466 = vld [vmem:[#allocation7 + $0x28] sm:$0xff]
    %v467 = vld [vmem:[#allocation7 + $0x38] sm:$0xff]
    %v468 = vld [vmem:[#allocation7 + $0x48] sm:$0xff]
    %v469 = vld [vmem:[#allocation7 + $0x58] sm:$0xff]
    %v470 = vld [vmem:[#allocation7 + $0x68] sm:$0xff]
    %v471 = vld [vmem:[#allocation7 + $0x78] sm:$0xff]
    %v472 = vld [vmem:[#allocation7 + $0x88] sm:$0xff]
    %v473 = vld [vmem:[#allocation7 + $0x98] sm:$0xff]
    %v474 = vld [vmem:[#allocation7 + $0xa8] sm:$0xff]
    %v475 = vld [vmem:[#allocation7 + $0xb8] sm:$0xff]
    %v476 = vld [vmem:[#allocation7 + $0xc8] sm:$0xff]
    %v477 = vld [vmem:[#allocation7 + $0xd8] sm:$0xff]
    %v478 = vld [vmem:[#allocation7 + $0xe8] sm:$0xff]
    %v479 = vld [vmem:[#allocation7 + $0xf8] sm:$0xff]
    %v480 = vld [vmem:[#allocation7 + $0x108] sm:$0xff]
    %v481 = vld [vmem:[#allocation7 + $0x118] sm:$0xff]
    %v482 = vld [vmem:[#allocation7 + $0x128] sm:$0xff]
    %v483 = vld [vmem:[#allocation7 + $0x138] sm:$0xff]
    %v484 = vld [vmem:[#allocation7 + $0x148] sm:$0xff]
    %v485 = vld [vmem:[#allocation7 + $0x158] sm:$0xff]
    %v486 = vld [vmem:[#allocation7 + $0x168] sm:$0xff]
    %v487 = vld [vmem:[#allocation7 + $0x178] sm:$0xff]
    %v488 = vld [vmem:[#allocation7 + $0x188] sm:$0xff]
    %v489 = vld [vmem:[#allocation7 + $0x198] sm:$0xff]
    %v490 = vld [vmem:[#allocation7 + $0x1a8] sm:$0xff]
    %v491 = vld [vmem:[#allocation7 + $0x1b8] sm:$0xff]
    %v492 = vld [vmem:[#allocation7 + $0x1c8] sm:$0xff]
    %v493 = vld [vmem:[#allocation7 + $0x1d8] sm:$0xff]
    %v494 = vld [vmem:[#allocation7 + $0x1e8] sm:$0xff]
    %v495 = vld [vmem:[#allocation7 + $0x1f8] sm:$0xff]
    %v496 = vld [vmem:[%s4 + $0x6] sm:$0x3]
    %v498 = vlaneseq
    %v499 = vshrl.u32 %v498, 7
    %v500 = vsub.s32 0, %v499
    %v501 = vrot.slane %v496, %v500
    %v502 = vlaneseq
    %v503 = vshrl.u32 %v502, 7
    %v504 = vsub.s32 1, %v503
    %v505 = vrot.slane %v496, %v504
    %v540 = vunpack.c.l.b16 %v464
    %v541 = vunpack.c.h.b16 %v464
    %v542 = vunpack.c.l.b16 %v465
    %v543 = vunpack.c.h.b16 %v465
    %v544 = vunpack.c.l.b16 %v466
    %v545 = vunpack.c.h.b16 %v466
    %v546 = vunpack.c.l.b16 %v467
    %v547 = vunpack.c.h.b16 %v467
    %v548 = vunpack.c.l.b16 %v468
    %v549 = vunpack.c.h.b16 %v468
    %v550 = vunpack.c.l.b16 %v469
    %v551 = vunpack.c.h.b16 %v469
    %v552 = vunpack.c.l.b16 %v470
    %v553 = vunpack.c.h.b16 %v470
    %v554 = vunpack.c.l.b16 %v471
    %v555 = vunpack.c.h.b16 %v471
    %v556 = vunpack.c.l.b16 %v472
    %v557 = vunpack.c.h.b16 %v472
    %v558 = vunpack.c.l.b16 %v473
    %v559 = vunpack.c.h.b16 %v473
    %v560 = vunpack.c.l.b16 %v474
    %v561 = vunpack.c.h.b16 %v474
    %v562 = vunpack.c.l.b16 %v475
    %v563 = vunpack.c.h.b16 %v475
    %v564 = vunpack.c.l.b16 %v476
    %v565 = vunpack.c.h.b16 %v476
    %v566 = vunpack.c.l.b16 %v477
    %v567 = vunpack.c.h.b16 %v477
    %v568 = vunpack.c.l.b16 %v478
    %v569 = vunpack.c.h.b16 %v478
    %v570 = vunpack.c.l.b16 %v479
    %v571 = vunpack.c.h.b16 %v479
    %v572 = vunpack.c.l.b16 %v480
    %v573 = vunpack.c.h.b16 %v480
    %v574 = vunpack.c.l.b16 %v481
    %v575 = vunpack.c.h.b16 %v481
    %v576 = vunpack.c.l.b16 %v482
    %v577 = vunpack.c.h.b16 %v482
    %v578 = vunpack.c.l.b16 %v483
    %v579 = vunpack.c.h.b16 %v483
    %v580 = vunpack.c.l.b16 %v484
    %v581 = vunpack.c.h.b16 %v484
    %v582 = vunpack.c.l.b16 %v485
    %v583 = vunpack.c.h.b16 %v485
    %v584 = vunpack.c.l.b16 %v486
    %v585 = vunpack.c.h.b16 %v486
    %v586 = vunpack.c.l.b16 %v487
    %v587 = vunpack.c.h.b16 %v487
    %v588 = vunpack.c.l.b16 %v488
    %v589 = vunpack.c.h.b16 %v488
    %v590 = vunpack.c.l.b16 %v489
    %v591 = vunpack.c.h.b16 %v489
    %v592 = vunpack.c.l.b16 %v490
    %v593 = vunpack.c.h.b16 %v490
    %v594 = vunpack.c.l.b16 %v491
    %v595 = vunpack.c.h.b16 %v491
    %v596 = vunpack.c.l.b16 %v492
    %v597 = vunpack.c.h.b16 %v492
    %v598 = vunpack.c.l.b16 %v493
    %v599 = vunpack.c.h.b16 %v493
    %v600 = vunpack.c.l.b16 %v494
    %v601 = vunpack.c.h.b16 %v494
    %v602 = vunpack.c.l.b16 %v495
    %v603 = vunpack.c.h.b16 %v495
    %v604 = vpack.c.b16 %v542, %v540
    %v605 = vpack.c.b16 %v543, %v541
    %v606 = vpack.c.b16 %v546, %v544
    %v607 = vpack.c.b16 %v547, %v545
    %v608 = vpack.c.b16 %v550, %v548
    %v609 = vpack.c.b16 %v551, %v549
    %v610 = vpack.c.b16 %v554, %v552
    %v611 = vpack.c.b16 %v555, %v553
    %v612 = vpack.c.b16 %v558, %v556
    %v613 = vpack.c.b16 %v559, %v557
    %v614 = vpack.c.b16 %v562, %v560
    %v615 = vpack.c.b16 %v563, %v561
    %v616 = vpack.c.b16 %v566, %v564
    %v617 = vpack.c.b16 %v567, %v565
    %v618 = vpack.c.b16 %v570, %v568
    %v619 = vpack.c.b16 %v571, %v569
    %v620 = vpack.c.b16 %v574, %v572
    %v621 = vpack.c.b16 %v575, %v573
    %v622 = vpack.c.b16 %v578, %v576
    %v623 = vpack.c.b16 %v579, %v577
    %v624 = vpack.c.b16 %v582, %v580
    %v625 = vpack.c.b16 %v583, %v581
    %v626 = vpack.c.b16 %v586, %v584
    %v627 = vpack.c.b16 %v587, %v585
    %v628 = vpack.c.b16 %v590, %v588
    %v629 = vpack.c.b16 %v591, %v589
    %v630 = vpack.c.b16 %v594, %v592
    %v631 = vpack.c.b16 %v595, %v593
    %v632 = vpack.c.b16 %v598, %v596
    %v633 = vpack.c.b16 %v599, %v597
    %v634 = vpack.c.b16 %v602, %v600
    %v635 = vpack.c.b16 %v603, %v601
    %668 = vmatprep.subr.bf16.mxu0 %v605
    %669 = vmatpush1.bf16.msra.mxu0 %v604
    %670 = vmatprep.subr.bf16.mxu0 %v607
    %671 = vmatpush1.bf16.msra.mxu0 %v606
    %672 = vmatprep.subr.bf16.mxu0 %v609
    %673 = vmatpush1.bf16.msra.mxu0 %v608
    %674 = vmatprep.subr.bf16.mxu0 %v611
    %675 = vmatpush1.bf16.msra.mxu0 %v610
    %676 = vmatprep.subr.bf16.mxu0 %v613
    %677 = vmatpush1.bf16.msra.mxu0 %v612
    %678 = vmatprep.subr.bf16.mxu0 %v615
    %679 = vmatpush1.bf16.msra.mxu0 %v614
    %680 = vmatprep.subr.bf16.mxu0 %v617
    %681 = vmatpush1.bf16.msra.mxu0 %v616
    %682 = vmatprep.subr.bf16.mxu0 %v619
    %683 = vmatpush1.bf16.msra.mxu0 %v618
    %684 = vmatprep.subr.bf16.mxu0 %v621
    %685 = vmatpush1.bf16.msra.mxu0 %v620
    %686 = vmatprep.subr.bf16.mxu0 %v623
    %687 = vmatpush1.bf16.msra.mxu0 %v622
    %688 = vmatprep.subr.bf16.mxu0 %v625
    %689 = vmatpush1.bf16.msra.mxu0 %v624
    %690 = vmatprep.subr.bf16.mxu0 %v627
    %691 = vmatpush1.bf16.msra.mxu0 %v626
    %692 = vmatprep.subr.bf16.mxu0 %v629
    %693 = vmatpush1.bf16.msra.mxu0 %v628
    %694 = vmatprep.subr.bf16.mxu0 %v631
    %695 = vmatpush1.bf16.msra.mxu0 %v630
    %696 = vmatprep.subr.bf16.mxu0 %v633
    %697 = vmatpush1.bf16.msra.mxu0 %v632
    %698 = vmatprep.subr.bf16.mxu0 %v635
    %699 = vmatpush1.bf16.msra.mxu0 %v634
    %700 = vmatprep.mubr.bf16.mxu0 %v216
    %701 = vmatmul.mubr.bf16.gmra.mrb[0].mxu0 %v215
    %v702 = vpop.f32.mrb[0].mxu0
    %v703 = vadd.f32 %v501, %v702
    %v704 = vpop.f32.mrb[0].mxu0
    %v705 = vadd.f32 %v505, %v704
    %v706 = vpop.f32.mrb[0].mxu0
    %v707 = vpop.f32.mrb[0].mxu0
    %708 = vdwg.mxu0
    %v709 = vtanh.pop %v703
    %v710 = vtanh.pop %v705
    %v711 = vpack.c.bf16 %v462, %v462
    %v712 = vpack.c.bf16 %v463, %v463
    %v713 = vld [vmem:[#allocation8] sm:$0xf]
    %v714 = vld [vmem:[#allocation8 + $0x4] sm:$0xf]
    %v715 = vld [vmem:[#allocation8 + $0x8] sm:$0xf]
    %v716 = vld [vmem:[#allocation8 + $0xc] sm:$0xf]
    %v717 = vld [vmem:[#allocation8 + $0x10] sm:$0xf]
    %v718 = vld [vmem:[#allocation8 + $0x14] sm:$0xf]
    %v719 = vld [vmem:[#allocation8 + $0x18] sm:$0xf]
    %v720 = vld [vmem:[#allocation8 + $0x1c] sm:$0xf]
    %v721 = vld [vmem:[#allocation8 + $0x20] sm:$0xf]
    %v722 = vld [vmem:[#allocation8 + $0x24] sm:$0xf]
    %v723 = vld [vmem:[#allocation8 + $0x28] sm:$0xf]
    %v724 = vld [vmem:[#allocation8 + $0x2c] sm:$0xf]
    %v725 = vld [vmem:[#allocation8 + $0x30] sm:$0xf]
    %v726 = vld [vmem:[#allocation8 + $0x34] sm:$0xf]
    %v727 = vld [vmem:[#allocation8 + $0x38] sm:$0xf]
    %v728 = vld [vmem:[#allocation8 + $0x3c] sm:$0xf]
    %v729 = vld [vmem:[#allocation8 + $0x40] sm:$0xf]
    %v730 = vld [vmem:[#allocation8 + $0x44] sm:$0xf]
    %v731 = vld [vmem:[#allocation8 + $0x48] sm:$0xf]
    %v732 = vld [vmem:[#allocation8 + $0x4c] sm:$0xf]
    %v733 = vld [vmem:[#allocation8 + $0x50] sm:$0xf]
    %v734 = vld [vmem:[#allocation8 + $0x54] sm:$0xf]
    %v735 = vld [vmem:[#allocation8 + $0x58] sm:$0xf]
    %v736 = vld [vmem:[#allocation8 + $0x5c] sm:$0xf]
    %v737 = vld [vmem:[#allocation8 + $0x60] sm:$0xf]
    %v738 = vld [vmem:[#allocation8 + $0x64] sm:$0xf]
    %v739 = vld [vmem:[#allocation8 + $0x68] sm:$0xf]
    %v740 = vld [vmem:[#allocation8 + $0x6c] sm:$0xf]
    %v741 = vld [vmem:[#allocation8 + $0x70] sm:$0xf]
    %v742 = vld [vmem:[#allocation8 + $0x74] sm:$0xf]
    %v743 = vld [vmem:[#allocation8 + $0x78] sm:$0xf]
    %v744 = vld [vmem:[#allocation8 + $0x7c] sm:$0xf]
    %v745 = vpack.c.bf16 %v709, %v709
    %v746 = vpack.c.bf16 %v710, %v710
    %v747 = vld [vmem:[#allocation8 + $0x80] sm:$0xf]
    %v748 = vld [vmem:[#allocation8 + $0x84] sm:$0xf]
    %v749 = vld [vmem:[#allocation8 + $0x88] sm:$0xf]
    %v750 = vld [vmem:[#allocation8 + $0x8c] sm:$0xf]
    %v751 = vld [vmem:[#allocation8 + $0x90] sm:$0xf]
    %v752 = vld [vmem:[#allocation8 + $0x94] sm:$0xf]
    %v753 = vld [vmem:[#allocation8 + $0x98] sm:$0xf]
    %v754 = vld [vmem:[#allocation8 + $0x9c] sm:$0xf]
    %v755 = vld [vmem:[#allocation8 + $0xa0] sm:$0xf]
    %v756 = vld [vmem:[#allocation8 + $0xa4] sm:$0xf]
    %v757 = vld [vmem:[#allocation8 + $0xa8] sm:$0xf]
    %v758 = vld [vmem:[#allocation8 + $0xac] sm:$0xf]
    %v759 = vld [vmem:[#allocation8 + $0xb0] sm:$0xf]
    %v760 = vld [vmem:[#allocation8 + $0xb4] sm:$0xf]
    %v761 = vld [vmem:[#allocation8 + $0xb8] sm:$0xf]
    %v762 = vld [vmem:[#allocation8 + $0xbc] sm:$0xf]
    %v763 = vld [vmem:[#allocation8 + $0xc0] sm:$0xf]
    %v764 = vld [vmem:[#allocation8 + $0xc4] sm:$0xf]
    %v765 = vld [vmem:[#allocation8 + $0xc8] sm:$0xf]
    %v766 = vld [vmem:[#allocation8 + $0xcc] sm:$0xf]
    %v767 = vld [vmem:[#allocation8 + $0xd0] sm:$0xf]
    %v768 = vld [vmem:[#allocation8 + $0xd4] sm:$0xf]
    %v769 = vld [vmem:[#allocation8 + $0xd8] sm:$0xf]
    %v770 = vld [vmem:[#allocation8 + $0xdc] sm:$0xf]
    %v771 = vld [vmem:[#allocation8 + $0xe0] sm:$0xf]
    %v772 = vld [vmem:[#allocation8 + $0xe4] sm:$0xf]
    %v773 = vld [vmem:[#allocation8 + $0xe8] sm:$0xf]
    %v774 = vld [vmem:[#allocation8 + $0xec] sm:$0xf]
    %v775 = vld [vmem:[#allocation8 + $0xf0] sm:$0xf]
    %v776 = vld [vmem:[#allocation8 + $0xf4] sm:$0xf]
    %v777 = vld [vmem:[#allocation8 + $0xf8] sm:$0xf]
    %v778 = vld [vmem:[#allocation8 + $0xfc] sm:$0xf]
    %v811 = vunpack.c.l.b16 %v747
    %v812 = vunpack.c.l.b16 %v748
    %v813 = vunpack.c.l.b16 %v749
    %v814 = vunpack.c.l.b16 %v750
    %v815 = vunpack.c.l.b16 %v751
    %v816 = vunpack.c.l.b16 %v752
    %v817 = vunpack.c.l.b16 %v753
    %v818 = vunpack.c.l.b16 %v754
    %v819 = vunpack.c.l.b16 %v755
    %v820 = vunpack.c.l.b16 %v756
    %v821 = vunpack.c.l.b16 %v757
    %v822 = vunpack.c.l.b16 %v758
    %v823 = vunpack.c.l.b16 %v759
    %v824 = vunpack.c.l.b16 %v760
    %v825 = vunpack.c.l.b16 %v761
    %v826 = vunpack.c.l.b16 %v762
    %v827 = vunpack.c.l.b16 %v763
    %v828 = vunpack.c.l.b16 %v764
    %v829 = vunpack.c.l.b16 %v765
    %v830 = vunpack.c.l.b16 %v766
    %v831 = vunpack.c.l.b16 %v767
    %v832 = vunpack.c.l.b16 %v768
    %v833 = vunpack.c.l.b16 %v769
    %v834 = vunpack.c.l.b16 %v770
    %v835 = vunpack.c.l.b16 %v771
    %v836 = vunpack.c.l.b16 %v772
    %v837 = vunpack.c.l.b16 %v773
    %v838 = vunpack.c.l.b16 %v774
    %v839 = vunpack.c.l.b16 %v775
    %v840 = vunpack.c.l.b16 %v776
    %v841 = vunpack.c.l.b16 %v777
    %v842 = vunpack.c.l.b16 %v778
    %v843 = vpack.c.b16 %v812, %v811
    %v844 = vpack.c.b16 %v814, %v813
    %v845 = vpack.c.b16 %v816, %v815
    %v846 = vpack.c.b16 %v818, %v817
    %v847 = vpack.c.b16 %v820, %v819
    %v848 = vpack.c.b16 %v822, %v821
    %v849 = vpack.c.b16 %v824, %v823
    %v850 = vpack.c.b16 %v826, %v825
    %v851 = vpack.c.b16 %v828, %v827
    %v852 = vpack.c.b16 %v830, %v829
    %v853 = vpack.c.b16 %v832, %v831
    %v854 = vpack.c.b16 %v834, %v833
    %v855 = vpack.c.b16 %v836, %v835
    %v856 = vpack.c.b16 %v838, %v837
    %v857 = vpack.c.b16 %v840, %v839
    %v858 = vpack.c.b16 %v842, %v841
    %875 = vmatprep.subr.bf16.mxu0 0
    %876 = vmatpush1.bf16.msra.mxu0 %v843
    %877 = vmatprep.subr.bf16.mxu0 0
    %878 = vmatpush1.bf16.msra.mxu0 %v844
    %879 = vmatprep.subr.bf16.mxu0 0
    %880 = vmatpush1.bf16.msra.mxu0 %v845
    %881 = vmatprep.subr.bf16.mxu0 0
    %882 = vmatpush1.bf16.msra.mxu0 %v846
    %883 = vmatprep.subr.bf16.mxu0 0
    %884 = vmatpush1.bf16.msra.mxu0 %v847
    %885 = vmatprep.subr.bf16.mxu0 0
    %886 = vmatpush1.bf16.msra.mxu0 %v848
    %887 = vmatprep.subr.bf16.mxu0 0
    %888 = vmatpush1.bf16.msra.mxu0 %v849
    %889 = vmatprep.subr.bf16.mxu0 0
    %890 = vmatpush1.bf16.msra.mxu0 %v850
    %891 = vmatprep.subr.bf16.mxu0 0
    %892 = vmatpush1.bf16.msra.mxu0 %v851
    %893 = vmatprep.subr.bf16.mxu0 0
    %894 = vmatpush1.bf16.msra.mxu0 %v852
    %895 = vmatprep.subr.bf16.mxu0 0
    %896 = vmatpush1.bf16.msra.mxu0 %v853
    %897 = vmatprep.subr.bf16.mxu0 0
    %898 = vmatpush1.bf16.msra.mxu0 %v854
    %899 = vmatprep.subr.bf16.mxu0 0
    %900 = vmatpush1.bf16.msra.mxu0 %v855
    %901 = vmatprep.subr.bf16.mxu0 0
    %902 = vmatpush1.bf16.msra.mxu0 %v856
    %903 = vmatprep.subr.bf16.mxu0 0
    %904 = vmatpush1.bf16.msra.mxu0 %v857
    %905 = vmatprep.subr.bf16.mxu0 0
    %906 = vmatpush1.bf16.msra.mxu0 %v858
    %907 = vmatprep.mubr.bf16.mxu0 %v746
    %908 = vmatmul.mubr.bf16.gmra.mrb[0].mxu0 %v745
    %v909 = vpop.f32.mrb[0].mxu0
    %v910 = vadd.f32 0.0, %v909
    %v911 = vpop.f32.mrb[0].mxu0
    %v912 = vpop.f32.mrb[0].mxu0
    %v913 = vpop.f32.mrb[0].mxu0
    %914 = vdwg.mxu0
    %v947 = vunpack.c.l.b16 %v713
    %v948 = vunpack.c.l.b16 %v714
    %v949 = vunpack.c.l.b16 %v715
    %v950 = vunpack.c.l.b16 %v716
    %v951 = vunpack.c.l.b16 %v717
    %v952 = vunpack.c.l.b16 %v718
    %v953 = vunpack.c.l.b16 %v719
    %v954 = vunpack.c.l.b16 %v720
    %v955 = vunpack.c.l.b16 %v721
    %v956 = vunpack.c.l.b16 %v722
    %v957 = vunpack.c.l.b16 %v723
    %v958 = vunpack.c.l.b16 %v724
    %v959 = vunpack.c.l.b16 %v725
    %v960 = vunpack.c.l.b16 %v726
    %v961 = vunpack.c.l.b16 %v727
    %v962 = vunpack.c.l.b16 %v728
    %v963 = vunpack.c.l.b16 %v729
    %v964 = vunpack.c.l.b16 %v730
    %v965 = vunpack.c.l.b16 %v731
    %v966 = vunpack.c.l.b16 %v732
    %v967 = vunpack.c.l.b16 %v733
    %v968 = vunpack.c.l.b16 %v734
    %v969 = vunpack.c.l.b16 %v735
    %v970 = vunpack.c.l.b16 %v736
    %v971 = vunpack.c.l.b16 %v737
    %v972 = vunpack.c.l.b16 %v738
    %v973 = vunpack.c.l.b16 %v739
    %v974 = vunpack.c.l.b16 %v740
    %v975 = vunpack.c.l.b16 %v741
    %v976 = vunpack.c.l.b16 %v742
    %v977 = vunpack.c.l.b16 %v743
    %v978 = vunpack.c.l.b16 %v744
    %v979 = vpack.c.b16 %v948, %v947
    %v980 = vpack.c.b16 %v950, %v949
    %v981 = vpack.c.b16 %v952, %v951
    %v982 = vpack.c.b16 %v954, %v953
    %v983 = vpack.c.b16 %v956, %v955
    %v984 = vpack.c.b16 %v958, %v957
    %v985 = vpack.c.b16 %v960, %v959
    %v986 = vpack.c.b16 %v962, %v961
    %v987 = vpack.c.b16 %v964, %v963
    %v988 = vpack.c.b16 %v966, %v965
    %v989 = vpack.c.b16 %v968, %v967
    %v990 = vpack.c.b16 %v970, %v969
    %v991 = vpack.c.b16 %v972, %v971
    %v992 = vpack.c.b16 %v974, %v973
    %v993 = vpack.c.b16 %v976, %v975
    %v994 = vpack.c.b16 %v978, %v977
    %1011 = vmatprep.subr.bf16.mxu0 0
    %1012 = vmatpush1.bf16.msra.mxu0 %v979
    %1013 = vmatprep.subr.bf16.mxu0 0
    %1014 = vmatpush1.bf16.msra.mxu0 %v980
    %1015 = vmatprep.subr.bf16.mxu0 0
    %1016 = vmatpush1.bf16.msra.mxu0 %v981
    %1017 = vmatprep.subr.bf16.mxu0 0
    %1018 = vmatpush1.bf16.msra.mxu0 %v982
    %1019 = vmatprep.subr.bf16.mxu0 0
    %1020 = vmatpush1.bf16.msra.mxu0 %v983
    %1021 = vmatprep.subr.bf16.mxu0 0
    %1022 = vmatpush1.bf16.msra.mxu0 %v984
    %1023 = vmatprep.subr.bf16.mxu0 0
    %1024 = vmatpush1.bf16.msra.mxu0 %v985
    %1025 = vmatprep.subr.bf16.mxu0 0
    %1026 = vmatpush1.bf16.msra.mxu0 %v986
    %1027 = vmatprep.subr.bf16.mxu0 0
    %1028 = vmatpush1.bf16.msra.mxu0 %v987
    %1029 = vmatprep.subr.bf16.mxu0 0
    %1030 = vmatpush1.bf16.msra.mxu0 %v988
    %1031 = vmatprep.subr.bf16.mxu0 0
    %1032 = vmatpush1.bf16.msra.mxu0 %v989
    %1033 = vmatprep.subr.bf16.mxu0 0
    %1034 = vmatpush1.bf16.msra.mxu0 %v990
    %1035 = vmatprep.subr.bf16.mxu0 0
    %1036 = vmatpush1.bf16.msra.mxu0 %v991
    %1037 = vmatprep.subr.bf16.mxu0 0
    %1038 = vmatpush1.bf16.msra.mxu0 %v992
    %1039 = vmatprep.subr.bf16.mxu0 0
    %1040 = vmatpush1.bf16.msra.mxu0 %v993
    %1041 = vmatprep.subr.bf16.mxu0 0
    %1042 = vmatpush1.bf16.msra.mxu0 %v994
    %1043 = vmatprep.mubr.bf16.mxu0 %v712
    %1044 = vmatmul.mubr.bf16.gmra.mrb[0].mxu0 %v711
    %v1045 = vpop.f32.mrb[0].mxu0
    %v1046 = vadd.f32 %v910, %v1045
    %v1047 = vpop.f32.mrb[0].mxu0
    %v1048 = vpop.f32.mrb[0].mxu0
    %v1049 = vpop.f32.mrb[0].mxu0
    %1050 = vdwg.mxu0
    %v1051 = vld [vmem:[%s4 + $0x8] sm:$0x1]
    %v1053 = vlaneseq
    %v1054 = vshrl.u32 %v1053, 7
    %v1055 = vsub.s32 0, %v1054
    %v1056 = vrot.slane %v1051, %v1055
    %v1058 = vadd.f32 %v1046, %v1056
    %1059 = vst [vmem:[#allocation10] sm:$0xff] %v1058
    // Predicated region
    $region38: #{tpu_custom_call.1} parent=1 // pred_check
      _
    $region39: #{tpu_custom_call.1} parent=1 // pred_check_branch
      %1061 = sbr.rel (0) target = $region41
    $region40: #{tpu_custom_call.1} parent=1 // pred_region
      %s1063 = ssub.s32 128, 128
      %1064 = vsyncadd [#allocation4], %s1063
      %s1066 = sshll.u32 [#allocation10], 4
      %s1067 = int_to_ptr.vmem [resolvable:$true] %s1066
      %1069 = dma.vmem_to_hbm [thread:$0]  %s1067, 128, %s5, [#allocation4]
    $region41: #{tpu_custom_call.1} parent=1 // pred_fallthru
      _
    // Predicated region
    $region42: #{tpu_custom_call.1} parent=1 // pred_check
      _
    $region43: #{tpu_custom_call.1} parent=1 // pred_check_branch
      %1071 = sbr.rel (0) target = $region45
    $region44: #{tpu_custom_call.1} parent=1 // pred_region
      %1072 = dma.done [#allocation4], 128
    $region45: #{tpu_custom_call.1} parent=1 // pred_fallthru
      _
    %1073 = vsyncpa [#allocation3], 1
    %1074 = vsyncpa [#allocation6], 1
    %1075 = vsyncpa [#allocation9], 1
    %1076 = vsyncpa [#allocation4], 1

</llo_original>
